<compile_context>
chip_gen: v6e
topology: v6e:2x2x1
jax: 0.10.0
libtpu: 0.0.40
codegen_flags: <defaults>
</compile_context>

<pallas_src>
import jax
import jax.numpy as jnp
from jax.experimental import pallas as pl
from jax.experimental.pallas import tpu as pltpu

IN_DIM = 256
HID_DIM = 128
OUT_DIM = 64
CAT_DIM = 3 * HID_DIM   # 384: concatenated fused-layer K dimension
TB_MAX = 1024           # max batch-tile rows (fits default scoped VMEM on v5e/v6e/v7x)


def siamese_kernel(x1_ref, x2_ref, x3_ref, wa_ref, ba_ref, wc_ref,
                   bsa_ref, wsb_ref, bsb_ref, out_ref):
    """One batch tile of the fully fused forward pass."""
    hs = []
    for i, x_ref in enumerate((x1_ref, x2_ref, x3_ref)):      # static unroll
        x = x_ref[...].astype(jnp.bfloat16)                    # f32->bf16 in-kernel (VPU)
        h = jnp.dot(x, wa_ref[i], preferred_element_type=jnp.float32)
        h = jnp.maximum(h + ba_ref[i], 0.0)                    # branch ReLU in f32
        hs.append(h.astype(jnp.bfloat16))
    h_cat = jnp.concatenate(hs, axis=-1)                       # (TB, 384) bf16
    # Fused (branch layer-2 + shared layer-1): a single K=384 matmul.
    z = jnp.dot(h_cat, wc_ref[...], preferred_element_type=jnp.float32)
    z = jnp.maximum(z + bsa_ref[...], 0.0)                     # shared ReLU in f32
    out = jnp.dot(z.astype(jnp.bfloat16), wsb_ref[...],
                  preferred_element_type=jnp.float32) + bsb_ref[...]
    out_ref[...] = out.astype(out_ref.dtype)                   # (TB, 64) f32


def _num_tensorcores():
    """2 on dual-TC v7x, else 1 (v5e/v6e are single-TensorCore)."""
    try:
        kind = jax.devices()[0].device_kind.lower()
        if "v7" in kind or "7x" in kind:
            return 2
    except Exception:
        pass
    return 1


def _choose_tiling(batch, n_tc):
    """Return (tile_rows, padded_batch)."""
    if batch <= TB_MAX:
        if n_tc > 1 and batch % (8 * n_tc) == 0:
            return batch // n_tc, batch          # give every TensorCore a tile
        return batch, batch                      # single full-dim block, no pad
    if batch % 8 == 0:
        for t in range(TB_MAX, 127, -8):         # largest divisor tile -> no pad pass
            if batch % t == 0:
                return t, batch
    bp = -(-batch // TB_MAX) * TB_MAX            # rare fallback: pad rows to a tile multiple
    return TB_MAX, bp


def _const_spec(shape):
    n = len(shape)
    return pl.BlockSpec(shape, lambda i, _n=n: (0,) * _n)


@jax.jit
def siamese_forward(x1, x2, x3, params):
    wa, ba, wc, bsa, wsb, bsb = params
    batch = x1.shape[0]
    tb, bp = _choose_tiling(batch, _num_tensorcores())

    def prep(x):                                  # rows-only pad; no-op in the common case
        return x if bp == batch else jnp.pad(x, ((0, bp - batch), (0, 0)))

    x1p, x2p, x3p = prep(x1), prep(x2), prep(x3)
    x_spec = pl.BlockSpec((tb, IN_DIM), lambda i: (i, 0))

    out = pl.pallas_call(
        siamese_kernel,
        out_shape=jax.ShapeDtypeStruct((bp, OUT_DIM), jnp.float32),
        grid=(bp // tb,),
        in_specs=[
            x_spec, x_spec, x_spec,
            _const_spec(wa.shape), _const_spec(ba.shape), _const_spec(wc.shape),
            _const_spec(bsa.shape), _const_spec(wsb.shape), _const_spec(bsb.shape),
        ],
        out_specs=pl.BlockSpec((tb, OUT_DIM), lambda i: (i, 0)),
        compiler_params=pltpu.CompilerParams(
            dimension_semantics=("parallel",)),
    )(x1p, x2p, x3p, wa, ba, wc, bsa, wsb, bsb)
    return out if bp == batch else out[:batch]


def init_torch_params(key):
    """PyTorch nn.Linear default init: U(-1/sqrt(fan_in), +1/sqrt(fan_in))."""
    def linear(k, fan_in, fan_out):
        kw, kb = jax.random.split(k)
        bound = 1.0 / (fan_in ** 0.5)
        w = jax.random.uniform(kw, (fan_in, fan_out), jnp.float32, -bound, bound)
        b = jax.random.uniform(kb, (fan_out,), jnp.float32, -bound, bound)
        return w, b

    keys = jax.random.split(key, 8)
    branches = []
    for i in range(3):  # fc1 / fc2 / fc3
        w1, b1 = linear(keys[2 * i], IN_DIM, HID_DIM)
        w2, b2 = linear(keys[2 * i + 1], HID_DIM, OUT_DIM)
        branches.append((w1, b1, w2, b2))
    ws1, bs1 = linear(keys[6], IN_DIM, HID_DIM)      # shared_fc layer 1
    ws2, bs2 = linear(keys[7], HID_DIM, OUT_DIM)     # shared_fc layer 2
    return branches, (ws1, bs1, ws2, bs2)


def fuse_params(branches, shared):
    """One-time offline fusion / cast of the torch-style weights."""
    ws1, bs1, ws2, bs2 = shared
    # Only rows 0:192 of shared_fc[0].weight are reachable (see module NOTE).
    wsa = ws1[: 3 * OUT_DIM].reshape(3, OUT_DIM, HID_DIM)              # (3, 64, 128)

    wa = jnp.stack([b[0] for b in branches])                           # (3, 256, 128)
    ba = jnp.stack([b[1] for b in branches])[:, None, :]               # (3, 1, 128)
    # Fuse branch layer-2 with shared layer-1 (no nonlinearity between them)
    # and stack along K so the kernel does one (TB,384)x(384,128) matmul.
    wc = jnp.concatenate([branches[i][2] @ wsa[i] for i in range(3)], axis=0)  # (384, 128)
    bsa = bs1 + sum(branches[i][3] @ wsa[i] for i in range(3))         # (128,)

    return (wa.astype(jnp.bfloat16),
            ba.astype(jnp.float32),
            wc.astype(jnp.bfloat16),
            bsa[None, :].astype(jnp.float32),
            ws2.astype(jnp.bfloat16),                                  # (128, 64)
            bs2[None, :].astype(jnp.float32))                          # (1, 64)


def reference_fused(x1, x2, x3, params):
    """Pure-JAX mirror of the kernel math (same bf16 rounding, f32 accumulation)."""
    wa, ba, wc, bsa, wsb, bsb = params
    f32 = lambda a: a.astype(jnp.float32)
    bf = lambda a: a.astype(jnp.bfloat16)
    hs = []
    for i, x in enumerate((x1, x2, x3)):
        h = jnp.maximum(f32(bf(x)) @ f32(wa[i]) + ba[i], 0.0)
        hs.append(f32(bf(h)))
    h_cat = jnp.concatenate(hs, axis=-1)
    z = jnp.maximum(h_cat @ f32(wc) + bsa, 0.0)
    return f32(bf(z)) @ f32(wsb) + bsb


def reference_torch(x1, x2, x3, branches, shared):
    """Unfused f32 mirror of the torch module (192-dim concat zero-padded to 256)."""
    def branch(x, p):
        w1, b1, w2, b2 = p
        return jnp.maximum(x @ w1 + b1, 0.0) @ w2 + b2
    o = jnp.concatenate([branch(x, p) for x, p in zip((x1, x2, x3), branches)], axis=1)
    o = jnp.pad(o, ((0, 0), (0, IN_DIM - 3 * OUT_DIM)))
    ws1, bs1, ws2, bs2 = shared
    return jnp.maximum(o @ ws1 + bs1, 0.0) @ ws2 + bs2


if __name__ == "__main__":
    key = jax.random.PRNGKey(0)
    kp, k1, k2, k3 = jax.random.split(key, 4)
    branches, shared = init_torch_params(kp)
    params = fuse_params(branches, shared)

    B = 8  # small demo batch; kernel tiles / handles any batch size
    x1 = jax.random.normal(k1, (B, IN_DIM), jnp.float32)
    x2 = jax.random.normal(k2, (B, IN_DIM), jnp.float32)
    x3 = jax.random.normal(k3, (B, IN_DIM), jnp.float32)

    out = jax.block_until_ready(siamese_forward(x1, x2, x3, params))
    assert out.shape == (B, OUT_DIM)

    # Exact-path check (mirrors the kernel's bf16 rounding / f32 accumulation).
    ref_k = reference_fused(x1, x2, x3, params)
    assert jnp.allclose(out, ref_k, atol=2e-3, rtol=2e-3), "mismatch vs fused reference"

    # Semantics check against the unfused f32 torch-style math (bf16-level tolerance).
    ref_t = reference_torch(x1, x2, x3, branches, shared)
    assert jnp.allclose(out, ref_t, atol=5e-2, rtol=5e-2), "mismatch vs torch-style reference"

    print("KERNEL_OK")
</pallas_src>

<mosaic_0001>
module attributes {stable_mosaic.version = 11 : i64} {
  func.func @siamese_kernel(%arg0: i32, %arg1: memref<8x256xf32, #tpu.memory_space<vmem>>, %arg2: memref<8x256xf32, #tpu.memory_space<vmem>>, %arg3: memref<8x256xf32, #tpu.memory_space<vmem>>, %arg4: memref<3x256x128xbf16, #tpu.memory_space<vmem>>, %arg5: memref<3x1x128xf32, #tpu.memory_space<vmem>>, %arg6: memref<384x128xbf16, #tpu.memory_space<vmem>>, %arg7: memref<1x128xf32, #tpu.memory_space<vmem>>, %arg8: memref<128x64xbf16, #tpu.memory_space<vmem>>, %arg9: memref<1x64xf32, #tpu.memory_space<vmem>>, %arg10: memref<8x64xf32, #tpu.memory_space<vmem>>) attributes {dimension_semantics = [#tpu.dimension_semantics<parallel>], iteration_bounds = array<i64: 1>, scalar_prefetch = 0 : i64, scratch_operands = 0 : i64, tpu.core_type = #tpu.core_type<tc>, window_params = [{transform_indices = @transform_0, window_bounds = array<i64: 8, 256>}, {transform_indices = @transform_1, window_bounds = array<i64: 8, 256>}, {transform_indices = @transform_2, window_bounds = array<i64: 8, 256>}, {pipeline_mode = #tpu.pipeline_mode<synchronous>, transform_indices = @transform_3, window_bounds = array<i64: 3, 256, 128>}, {pipeline_mode = #tpu.pipeline_mode<synchronous>, transform_indices = @transform_4, window_bounds = array<i64: 3, 1, 128>}, {pipeline_mode = #tpu.pipeline_mode<synchronous>, transform_indices = @transform_5, window_bounds = array<i64: 384, 128>}, {pipeline_mode = #tpu.pipeline_mode<synchronous>, transform_indices = @transform_6, window_bounds = array<i64: 1, 128>}, {pipeline_mode = #tpu.pipeline_mode<synchronous>, transform_indices = @transform_7, window_bounds = array<i64: 128, 64>}, {pipeline_mode = #tpu.pipeline_mode<synchronous>, transform_indices = @transform_8, window_bounds = array<i64: 1, 64>}, {transform_indices = @transform_9, window_bounds = array<i64: 8, 64>}]} {
    %c0 = arith.constant 0 : index
    %c0_0 = arith.constant 0 : index
    %0 = vector.load %arg1[%c0, %c0_0] : memref<8x256xf32, #tpu.memory_space<vmem>>, vector<8x256xf32>
    %1 = arith.truncf %0 : vector<8x256xf32> to vector<8x256xbf16>
    %c0_1 = arith.constant 0 : index
    %c0_2 = arith.constant 0 : index
    %c0_3 = arith.constant 0 : index
    %2 = vector.load %arg4[%c0_1, %c0_2, %c0_3] : memref<3x256x128xbf16, #tpu.memory_space<vmem>>, vector<1x256x128xbf16>
    %3 = vector.shape_cast %2 : vector<1x256x128xbf16> to vector<256x128xbf16>
    %cst = arith.constant dense<0.000000e+00> : vector<8x128xf32>
    %4 = tpu.matmul %1, %3, %cst {dimension_numbers = #tpu.dot_dimension_numbers<[1], [0], [0], [1], [0, 0, 1, 1], [], []>} : vector<8x256xbf16>, vector<256x128xbf16>, vector<8x128xf32> -> vector<8x128xf32>
    %c0_4 = arith.constant 0 : index
    %c0_5 = arith.constant 0 : index
    %c0_6 = arith.constant 0 : index
    %5 = vector.load %arg5[%c0_4, %c0_5, %c0_6] : memref<3x1x128xf32, #tpu.memory_space<vmem>>, vector<1x1x128xf32>
    %6 = vector.shape_cast %5 : vector<1x1x128xf32> to vector<1x128xf32>
    %7 = vector.broadcast %6 : vector<1x128xf32> to vector<8x128xf32>
    %8 = arith.addf %4, %7 : vector<8x128xf32>
    %cst_7 = arith.constant 0.000000e+00 : f32
    %9 = vector.broadcast %cst_7 : f32 to vector<8x128xf32>
    %10 = arith.maximumf %8, %9 : vector<8x128xf32>
    %11 = arith.truncf %10 : vector<8x128xf32> to vector<8x128xbf16>
    %c0_8 = arith.constant 0 : index
    %c0_9 = arith.constant 0 : index
    %12 = vector.load %arg2[%c0_8, %c0_9] : memref<8x256xf32, #tpu.memory_space<vmem>>, vector<8x256xf32>
    %13 = arith.truncf %12 : vector<8x256xf32> to vector<8x256xbf16>
    %c1 = arith.constant 1 : index
    %c0_10 = arith.constant 0 : index
    %c0_11 = arith.constant 0 : index
    %14 = vector.load %arg4[%c1, %c0_10, %c0_11] : memref<3x256x128xbf16, #tpu.memory_space<vmem>>, vector<1x256x128xbf16>
    %15 = vector.shape_cast %14 : vector<1x256x128xbf16> to vector<256x128xbf16>
    %cst_12 = arith.constant dense<0.000000e+00> : vector<8x128xf32>
    %16 = tpu.matmul %13, %15, %cst_12 {dimension_numbers = #tpu.dot_dimension_numbers<[1], [0], [0], [1], [0, 0, 1, 1], [], []>} : vector<8x256xbf16>, vector<256x128xbf16>, vector<8x128xf32> -> vector<8x128xf32>
    %c1_13 = arith.constant 1 : index
    %c0_14 = arith.constant 0 : index
    %c0_15 = arith.constant 0 : index
    %17 = vector.load %arg5[%c1_13, %c0_14, %c0_15] : memref<3x1x128xf32, #tpu.memory_space<vmem>>, vector<1x1x128xf32>
    %18 = vector.shape_cast %17 : vector<1x1x128xf32> to vector<1x128xf32>
    %19 = vector.broadcast %18 : vector<1x128xf32> to vector<8x128xf32>
    %20 = arith.addf %16, %19 : vector<8x128xf32>
    %cst_16 = arith.constant 0.000000e+00 : f32
    %21 = vector.broadcast %cst_16 : f32 to vector<8x128xf32>
    %22 = arith.maximumf %20, %21 : vector<8x128xf32>
    %23 = arith.truncf %22 : vector<8x128xf32> to vector<8x128xbf16>
    %c0_17 = arith.constant 0 : index
    %c0_18 = arith.constant 0 : index
    %24 = vector.load %arg3[%c0_17, %c0_18] : memref<8x256xf32, #tpu.memory_space<vmem>>, vector<8x256xf32>
    %25 = arith.truncf %24 : vector<8x256xf32> to vector<8x256xbf16>
    %c2 = arith.constant 2 : index
    %c0_19 = arith.constant 0 : index
    %c0_20 = arith.constant 0 : index
    %26 = vector.load %arg4[%c2, %c0_19, %c0_20] : memref<3x256x128xbf16, #tpu.memory_space<vmem>>, vector<1x256x128xbf16>
    %27 = vector.shape_cast %26 : vector<1x256x128xbf16> to vector<256x128xbf16>
    %cst_21 = arith.constant dense<0.000000e+00> : vector<8x128xf32>
    %28 = tpu.matmul %25, %27, %cst_21 {dimension_numbers = #tpu.dot_dimension_numbers<[1], [0], [0], [1], [0, 0, 1, 1], [], []>} : vector<8x256xbf16>, vector<256x128xbf16>, vector<8x128xf32> -> vector<8x128xf32>
    %c2_22 = arith.constant 2 : index
    %c0_23 = arith.constant 0 : index
    %c0_24 = arith.constant 0 : index
    %29 = vector.load %arg5[%c2_22, %c0_23, %c0_24] : memref<3x1x128xf32, #tpu.memory_space<vmem>>, vector<1x1x128xf32>
    %30 = vector.shape_cast %29 : vector<1x1x128xf32> to vector<1x128xf32>
    %31 = vector.broadcast %30 : vector<1x128xf32> to vector<8x128xf32>
    %32 = arith.addf %28, %31 : vector<8x128xf32>
    %cst_25 = arith.constant 0.000000e+00 : f32
    %33 = vector.broadcast %cst_25 : f32 to vector<8x128xf32>
    %34 = arith.maximumf %32, %33 : vector<8x128xf32>
    %35 = arith.truncf %34 : vector<8x128xf32> to vector<8x128xbf16>
    %36 = tpu.concatenate %11, %23, %35 in 1 : vector<8x128xbf16>, vector<8x128xbf16>, vector<8x128xbf16> -> vector<8x384xbf16>
    %c0_26 = arith.constant 0 : index
    %c0_27 = arith.constant 0 : index
    %37 = vector.load %arg6[%c0_26, %c0_27] : memref<384x128xbf16, #tpu.memory_space<vmem>>, vector<384x128xbf16>
    %cst_28 = arith.constant dense<0.000000e+00> : vector<8x128xf32>
    %38 = tpu.matmul %36, %37, %cst_28 {dimension_numbers = #tpu.dot_dimension_numbers<[1], [0], [0], [1], [0, 0, 1, 1], [], []>} : vector<8x384xbf16>, vector<384x128xbf16>, vector<8x128xf32> -> vector<8x128xf32>
    %c0_29 = arith.constant 0 : index
    %c0_30 = arith.constant 0 : index
    %39 = vector.load %arg7[%c0_29, %c0_30] : memref<1x128xf32, #tpu.memory_space<vmem>>, vector<1x128xf32>
    %40 = vector.broadcast %39 : vector<1x128xf32> to vector<8x128xf32>
    %41 = arith.addf %38, %40 : vector<8x128xf32>
    %cst_31 = arith.constant 0.000000e+00 : f32
    %42 = vector.broadcast %cst_31 : f32 to vector<8x128xf32>
    %43 = arith.maximumf %41, %42 : vector<8x128xf32>
    %44 = arith.truncf %43 : vector<8x128xf32> to vector<8x128xbf16>
    %c0_32 = arith.constant 0 : index
    %c0_33 = arith.constant 0 : index
    %45 = vector.load %arg8[%c0_32, %c0_33] : memref<128x64xbf16, #tpu.memory_space<vmem>>, vector<128x64xbf16>
    %cst_34 = arith.constant dense<0.000000e+00> : vector<8x64xf32>
    %46 = tpu.matmul %44, %45, %cst_34 {dimension_numbers = #tpu.dot_dimension_numbers<[1], [0], [0], [1], [0, 0, 1, 1], [], []>} : vector<8x128xbf16>, vector<128x64xbf16>, vector<8x64xf32> -> vector<8x64xf32>
    %c0_35 = arith.constant 0 : index
    %c0_36 = arith.constant 0 : index
    %47 = vector.load %arg9[%c0_35, %c0_36] : memref<1x64xf32, #tpu.memory_space<vmem>>, vector<1x64xf32>
    %48 = vector.broadcast %47 : vector<1x64xf32> to vector<8x64xf32>
    %49 = arith.addf %46, %48 : vector<8x64xf32>
    %c0_37 = arith.constant 0 : index
    %c0_38 = arith.constant 0 : index
    %50 = vector.load %arg10[%c0_37, %c0_38] : memref<8x64xf32, #tpu.memory_space<vmem>>, vector<8x64xf32>
    tpu.vector_store %arg10[%c0_37, %c0_38], %49 {strides = array<i32>} : memref<8x64xf32, #tpu.memory_space<vmem>>, vector<8x64xf32>,
    return
  }
  func.func @transform_0(%arg0: i32) -> (i32, i32) {
    %c0_i32 = arith.constant 0 : i32
    %c0_i32_0 = arith.constant 0 : i32
    return %arg0, %c0_i32 : i32, i32
  }
  func.func @transform_1(%arg0: i32) -> (i32, i32) {
    %c0_i32 = arith.constant 0 : i32
    %c0_i32_0 = arith.constant 0 : i32
    return %arg0, %c0_i32 : i32, i32
  }
  func.func @transform_2(%arg0: i32) -> (i32, i32) {
    %c0_i32 = arith.constant 0 : i32
    %c0_i32_0 = arith.constant 0 : i32
    return %arg0, %c0_i32 : i32, i32
  }
  func.func @transform_3(%arg0: i32) -> (i32, i32, i32) {
    %c0_i32 = arith.constant 0 : i32
    %c0_i32_0 = arith.constant 0 : i32
    %c0_i32_1 = arith.constant 0 : i32
    %c0_i32_2 = arith.constant 0 : i32
    return %c0_i32, %c0_i32_0, %c0_i32_1 : i32, i32, i32
  }
  func.func @transform_4(%arg0: i32) -> (i32, i32, i32) {
    %c0_i32 = arith.constant 0 : i32
    %c0_i32_0 = arith.constant 0 : i32
    %c0_i32_1 = arith.constant 0 : i32
    %c0_i32_2 = arith.constant 0 : i32
    return %c0_i32, %c0_i32_0, %c0_i32_1 : i32, i32, i32
  }
  func.func @transform_5(%arg0: i32) -> (i32, i32) {
    %c0_i32 = arith.constant 0 : i32
    %c0_i32_0 = arith.constant 0 : i32
    %c0_i32_1 = arith.constant 0 : i32
    return %c0_i32, %c0_i32_0 : i32, i32
  }
  func.func @transform_6(%arg0: i32) -> (i32, i32) {
    %c0_i32 = arith.constant 0 : i32
    %c0_i32_0 = arith.constant 0 : i32
    %c0_i32_1 = arith.constant 0 : i32
    return %c0_i32, %c0_i32_0 : i32, i32
  }
  func.func @transform_7(%arg0: i32) -> (i32, i32) {
    %c0_i32 = arith.constant 0 : i32
    %c0_i32_0 = arith.constant 0 : i32
    %c0_i32_1 = arith.constant 0 : i32
    return %c0_i32, %c0_i32_0 : i32, i32
  }
  func.func @transform_8(%arg0: i32) -> (i32, i32) {
    %c0_i32 = arith.constant 0 : i32
    %c0_i32_0 = arith.constant 0 : i32
    %c0_i32_1 = arith.constant 0 : i32
    return %c0_i32, %c0_i32_0 : i32, i32
  }
  func.func @transform_9(%arg0: i32) -> (i32, i32) {
    %c0_i32 = arith.constant 0 : i32
    %c0_i32_0 = arith.constant 0 : i32
    return %arg0, %c0_i32 : i32, i32
  }
}

</mosaic_0001>

<llo_original>
// kernel: siamese_forward.1
$region0: #{siamese_forward.1}
  #allocation0 [shape = 'u32[]', space=smem, size = 0x4, offset = 0x4, fixed_abs, tag = 'smem constant byte address 0x4 - core index']
  #allocation1 [shape = 'u32[144,128]{1,0:T(1,128)}', space=vmem, size = 0x12000, scoped, tag = 'internal scratch']
  %s0 = inlined_call_operand.vmem [shape: f32[8,256], index: 0, kind: input, shape index: {}]
  %s1 = inlined_call_operand.vmem [shape: f32[8,256], index: 1, kind: input, shape index: {}]
  %s2 = inlined_call_operand.vmem [shape: f32[8,256], index: 2, kind: input, shape index: {}]
  %s3 = inlined_call_operand.hbm [shape: bf16[3,256,128], index: 3, kind: input, shape index: {}]
  %s4 = inlined_call_operand.vmem [shape: f32[3,1,128], index: 4, kind: input, shape index: {}]
  %s5 = inlined_call_operand.hbm [shape: bf16[384,128], index: 5, kind: input, shape index: {}]
  %s6 = inlined_call_operand.vmem [shape: f32[1,128], index: 6, kind: input, shape index: {}]
  %s7 = inlined_call_operand.vmem [shape: bf16[128,64], index: 7, kind: input, shape index: {}]
  %s8 = inlined_call_operand.vmem [shape: f32[1,64], index: 8, kind: input, shape index: {}]
  %s9 = inlined_call_operand.hbm [shape: f32[8,64], index: 9, kind: output, shape index: {}]
  %s10 = sld [smem:[#allocation0]]
  $region54: #{siamese_forward.1} parent=0
    _
  %s12 = ssub.s32 1, %s10
  %s13 = scalar_select 0, %s12, %s10
  $region1: #{siamese_forward.1} parent=0
    #allocation2 [shape = 'u8[196608]{0}', space=vmem, size = 0x30000, scoped, tag = 'input window, operand 3, single buffered']
    #allocation3 [shape = 's32[1]{0}', space=sflag, size = 0x4, scoped, tag = 'scoped memory for siamese_forward.1']
    #allocation4 [shape = 's32[1]{0}', space=sflag, size = 0x4, scoped, tag = 'scoped memory for siamese_forward.1']
    #allocation5 [shape = 'u8[98304]{0}', space=vmem, size = 0x18000, scoped, tag = 'input window, operand 5, single buffered']
    #allocation6 [shape = 's32[1]{0}', space=sflag, size = 0x4, scoped, tag = 'scoped memory for siamese_forward.1']
    #allocation7 [shape = 'u8[4096]{0}', space=vmem, size = 0x1000, scoped, tag = 'output window, operand 0, single buffered']
    %14 = vsyncpa [#allocation3], 0
    %15 = vsyncpa [#allocation6], 0
    %16 = vsyncpa [#allocation4], 0
    // Predicated region
    $region2: #{siamese_forward.1} parent=1 // pred_check
      _
    $region3: #{siamese_forward.1} parent=1 // pred_check_branch
      %18 = sbr.rel (0) target = $region5
    $region4: #{siamese_forward.1} parent=1 // pred_region
      _
    $region5: #{siamese_forward.1} parent=1 // pred_fallthru
      _
    // Predicated region
    $region6: #{siamese_forward.1} parent=1 // pred_check
      _
    $region7: #{siamese_forward.1} parent=1 // pred_check_branch
      %20 = sbr.rel (0) target = $region9
    $region8: #{siamese_forward.1} parent=1 // pred_region
      _
    $region9: #{siamese_forward.1} parent=1 // pred_fallthru
      _
    // Predicated region
    $region10: #{siamese_forward.1} parent=1 // pred_check
      _
    $region11: #{siamese_forward.1} parent=1 // pred_check_branch
      %22 = sbr.rel (0) target = $region13
    $region12: #{siamese_forward.1} parent=1 // pred_region
      _
    $region13: #{siamese_forward.1} parent=1 // pred_fallthru
      _
    // Predicated region
    $region14: #{siamese_forward.1} parent=1 // pred_check
      _
    $region15: #{siamese_forward.1} parent=1 // pred_check_branch
      %24 = sbr.rel (0) target = $region17
    $region16: #{siamese_forward.1} parent=1 // pred_region
      %s26 = ssub.s32 6144, 6144
      %27 = vsyncadd [#allocation3], %s26
      %s28 = sshll.u32 [#allocation2], 4
      %s29 = int_to_ptr.vmem [resolvable:$true] %s28
      %34 = dma.hbm_to_vmem [thread:$0]  %s3, 6144, %s29, [#allocation3], 64, 64, 4
    $region17: #{siamese_forward.1} parent=1 // pred_fallthru
      _
    // Predicated region
    $region18: #{siamese_forward.1} parent=1 // pred_check
      _
    $region19: #{siamese_forward.1} parent=1 // pred_check_branch
      %36 = sbr.rel (0) target = $region21
    $region20: #{siamese_forward.1} parent=1 // pred_region
      _
    $region21: #{siamese_forward.1} parent=1 // pred_fallthru
      _
    // Predicated region
    $region22: #{siamese_forward.1} parent=1 // pred_check
      _
    $region23: #{siamese_forward.1} parent=1 // pred_check_branch
      %38 = sbr.rel (0) target = $region25
    $region24: #{siamese_forward.1} parent=1 // pred_region
      %s40 = ssub.s32 3072, 3072
      %41 = vsyncadd [#allocation6], %s40
      %s42 = sshll.u32 [#allocation5], 4
      %s43 = int_to_ptr.vmem [resolvable:$true] %s42
      %48 = dma.hbm_to_vmem [thread:$0]  %s5, 3072, %s43, [#allocation6], 64, 64, 4
    $region25: #{siamese_forward.1} parent=1 // pred_fallthru
      _
    // Predicated region
    $region26: #{siamese_forward.1} parent=1 // pred_check
      _
    $region27: #{siamese_forward.1} parent=1 // pred_check_branch
      %50 = sbr.rel (0) target = $region29
    $region28: #{siamese_forward.1} parent=1 // pred_region
      _
    $region29: #{siamese_forward.1} parent=1 // pred_fallthru
      _
    // Predicated region
    $region30: #{siamese_forward.1} parent=1 // pred_check
      _
    $region31: #{siamese_forward.1} parent=1 // pred_check_branch
      %52 = sbr.rel (0) target = $region33
    $region32: #{siamese_forward.1} parent=1 // pred_region
      _
    $region33: #{siamese_forward.1} parent=1 // pred_fallthru
      _
    // Predicated region
    $region34: #{siamese_forward.1} parent=1 // pred_check
      _
    $region35: #{siamese_forward.1} parent=1 // pred_check_branch
      %54 = sbr.rel (0) target = $region37
    $region36: #{siamese_forward.1} parent=1 // pred_region
      _
    $region37: #{siamese_forward.1} parent=1 // pred_fallthru
      _
    // Predicated region
    $region38: #{siamese_forward.1} parent=1 // pred_check
      _
    $region39: #{siamese_forward.1} parent=1 // pred_check_branch
      %56 = sbr.rel (0) target = $region41
    $region40: #{siamese_forward.1} parent=1 // pred_region
      %57 = dma.done [#allocation3], 6144
    $region41: #{siamese_forward.1} parent=1 // pred_fallthru
      _
    // Predicated region
    $region42: #{siamese_forward.1} parent=1 // pred_check
      _
    $region43: #{siamese_forward.1} parent=1 // pred_check_branch
      %59 = sbr.rel (0) target = $region45
    $region44: #{siamese_forward.1} parent=1 // pred_region
      %60 = dma.done [#allocation6], 3072
    $region45: #{siamese_forward.1} parent=1 // pred_fallthru
      _
    %v62 = vld [vmem:[%s0] sm:$0xff]
    %v63 = vld [vmem:[%s0 + $0x8] sm:$0xff]
    %v64 = vpack.c.bf16 %v62, %v62
    %v65 = vpack.c.bf16 %v63, %v63
    %v66 = vld [vmem:[#allocation2] sm:$0xf]
    %v67 = vld [vmem:[#allocation2 + $0x4] sm:$0xf]
    %v68 = vld [vmem:[#allocation2 + $0x8] sm:$0xf]
    %v69 = vld [vmem:[#allocation2 + $0xc] sm:$0xf]
    %v70 = vld [vmem:[#allocation2 + $0x10] sm:$0xf]
    %v71 = vld [vmem:[#allocation2 + $0x14] sm:$0xf]
    %v72 = vld [vmem:[#allocation2 + $0x18] sm:$0xf]
    %v73 = vld [vmem:[#allocation2 + $0x1c] sm:$0xf]
    %v74 = vld [vmem:[#allocation2 + $0x20] sm:$0xf]
    %v75 = vld [vmem:[#allocation2 + $0x24] sm:$0xf]
    %v76 = vld [vmem:[#allocation2 + $0x28] sm:$0xf]
    %v77 = vld [vmem:[#allocation2 + $0x2c] sm:$0xf]
    %v78 = vld [vmem:[#allocation2 + $0x30] sm:$0xf]
    %v79 = vld [vmem:[#allocation2 + $0x34] sm:$0xf]
    %v80 = vld [vmem:[#allocation2 + $0x38] sm:$0xf]
    %v81 = vld [vmem:[#allocation2 + $0x3c] sm:$0xf]
    %v82 = vld [vmem:[#allocation2 + $0x40] sm:$0xf]
    %v83 = vld [vmem:[#allocation2 + $0x44] sm:$0xf]
    %v84 = vld [vmem:[#allocation2 + $0x48] sm:$0xf]
    %v85 = vld [vmem:[#allocation2 + $0x4c] sm:$0xf]
    %v86 = vld [vmem:[#allocation2 + $0x50] sm:$0xf]
    %v87 = vld [vmem:[#allocation2 + $0x54] sm:$0xf]
    %v88 = vld [vmem:[#allocation2 + $0x58] sm:$0xf]
    %v89 = vld [vmem:[#allocation2 + $0x5c] sm:$0xf]
    %v90 = vld [vmem:[#allocation2 + $0x60] sm:$0xf]
    %v91 = vld [vmem:[#allocation2 + $0x64] sm:$0xf]
    %v92 = vld [vmem:[#allocation2 + $0x68] sm:$0xf]
    %v93 = vld [vmem:[#allocation2 + $0x6c] sm:$0xf]
    %v94 = vld [vmem:[#allocation2 + $0x70] sm:$0xf]
    %v95 = vld [vmem:[#allocation2 + $0x74] sm:$0xf]
    %v96 = vld [vmem:[#allocation2 + $0x78] sm:$0xf]
    %v97 = vld [vmem:[#allocation2 + $0x7c] sm:$0xf]
    %v98 = vld [vmem:[%s4] sm:$0x1]
    %v100 = vlaneseq
    %v101 = vshrl.u32 %v100, 7
    %v102 = vsub.s32 0, %v101
    %v103 = vrot.slane %v98, %v102
    %v137 = vunpack.c.l.b16 %v66
    %v138 = vunpack.c.l.b16 %v67
    %v139 = vunpack.c.l.b16 %v68
    %v140 = vunpack.c.l.b16 %v69
    %v141 = vunpack.c.l.b16 %v70
    %v142 = vunpack.c.l.b16 %v71
    %v143 = vunpack.c.l.b16 %v72
    %v144 = vunpack.c.l.b16 %v73
    %v145 = vunpack.c.l.b16 %v74
    %v146 = vunpack.c.l.b16 %v75
    %v147 = vunpack.c.l.b16 %v76
    %v148 = vunpack.c.l.b16 %v77
    %v149 = vunpack.c.l.b16 %v78
    %v150 = vunpack.c.l.b16 %v79
    %v151 = vunpack.c.l.b16 %v80
    %v152 = vunpack.c.l.b16 %v81
    %v153 = vunpack.c.l.b16 %v82
    %v154 = vunpack.c.l.b16 %v83
    %v155 = vunpack.c.l.b16 %v84
    %v156 = vunpack.c.l.b16 %v85
    %v157 = vunpack.c.l.b16 %v86
    %v158 = vunpack.c.l.b16 %v87
    %v159 = vunpack.c.l.b16 %v88
    %v160 = vunpack.c.l.b16 %v89
    %v161 = vunpack.c.l.b16 %v90
    %v162 = vunpack.c.l.b16 %v91
    %v163 = vunpack.c.l.b16 %v92
    %v164 = vunpack.c.l.b16 %v93
    %v165 = vunpack.c.l.b16 %v94
    %v166 = vunpack.c.l.b16 %v95
    %v167 = vunpack.c.l.b16 %v96
    %v168 = vunpack.c.l.b16 %v97
    %v169 = vpack.c.b16 %v138, %v137
    %v170 = vpack.c.b16 %v140, %v139
    %v171 = vpack.c.b16 %v142, %v141
    %v172 = vpack.c.b16 %v144, %v143
    %v173 = vpack.c.b16 %v146, %v145
    %v174 = vpack.c.b16 %v148, %v147
    %v175 = vpack.c.b16 %v150, %v149
    %v176 = vpack.c.b16 %v152, %v151
    %v177 = vpack.c.b16 %v154, %v153
    %v178 = vpack.c.b16 %v156, %v155
    %v179 = vpack.c.b16 %v158, %v157
    %v180 = vpack.c.b16 %v160, %v159
    %v181 = vpack.c.b16 %v162, %v161
    %v182 = vpack.c.b16 %v164, %v163
    %v183 = vpack.c.b16 %v166, %v165
    %v184 = vpack.c.b16 %v168, %v167
    %201 = vmatprep.subr.bf16.mxu0 0
    %202 = vmatpush1.bf16.msra.mxu0 %v176
    %203 = vmatprep.subr.bf16.mxu0 0
    %204 = vmatpush1.bf16.msra.mxu0 %v175
    %205 = vmatprep.subr.bf16.mxu0 0
    %206 = vmatpush1.bf16.msra.mxu0 %v174
    %207 = vmatprep.subr.bf16.mxu0 0
    %208 = vmatpush1.bf16.msra.mxu0 %v173
    %209 = vmatprep.subr.bf16.mxu0 0
    %210 = vmatpush1.bf16.msra.mxu0 %v172
    %211 = vmatprep.subr.bf16.mxu0 0
    %212 = vmatpush1.bf16.msra.mxu0 %v171
    %213 = vmatprep.subr.bf16.mxu0 0
    %214 = vmatpush1.bf16.msra.mxu0 %v170
    %215 = vmatprep.subr.bf16.mxu0 0
    %216 = vmatpush1.bf16.msra.mxu0 %v169
    %217 = vmatprep.subr.bf16.mxu0 0
    %218 = vmatpush2.bf16.msra.mxu0 %v184
    %219 = vmatprep.subr.bf16.mxu0 0
    %220 = vmatpush2.bf16.msra.mxu0 %v183
    %221 = vmatprep.subr.bf16.mxu0 0
    %222 = vmatpush2.bf16.msra.mxu0 %v182
    %223 = vmatprep.subr.bf16.mxu0 0
    %224 = vmatpush2.bf16.msra.mxu0 %v181
    %225 = vmatprep.subr.bf16.mxu0 0
    %226 = vmatpush2.bf16.msra.mxu0 %v180
    %227 = vmatprep.subr.bf16.mxu0 0
    %228 = vmatpush2.bf16.msra.mxu0 %v179
    %229 = vmatprep.subr.bf16.mxu0 0
    %230 = vmatpush2.bf16.msra.mxu0 %v178
    %231 = vmatprep.subr.bf16.mxu0 0
    %232 = vmatpush2.bf16.msra.mxu0 %v177
    %233 = vmatprep.mubr.bf16.mxu0 %v65
    %234 = vmatmul.mubr.bf16.gmra.mxu0 %v64
    %v235 = vpop.f32.mrf.mxu0
    %v236 = vadd.f32 %v103, %v235
    %v237 = vpop.f32.mrf.mxu0
    %v238 = vpop.f32.mrf.mxu0
    %v239 = vpop.f32.mrf.mxu0
    %240 = vdwg.mxu0
    %v241 = vmax.f32 %v236, 0.0
    %v242 = vpack.c.bf16 %v241, %v241
    %v243 = vld [vmem:[%s1] sm:$0xff]
    %v244 = vld [vmem:[%s1 + $0x8] sm:$0xff]
    %v245 = vpack.c.bf16 %v243, %v243
    %v246 = vpack.c.bf16 %v244, %v244
    %s247 = scalar_lea.vmem [#allocation2], 128
    %v248 = vld [vmem:[%s247] sm:$0xf]
    %v249 = vld [vmem:[%s247 + $0x4] sm:$0xf]
    %v250 = vld [vmem:[%s247 + $0x8] sm:$0xf]
    %v251 = vld [vmem:[%s247 + $0xc] sm:$0xf]
    %v252 = vld [vmem:[%s247 + $0x10] sm:$0xf]
    %v253 = vld [vmem:[%s247 + $0x14] sm:$0xf]
    %v254 = vld [vmem:[%s247 + $0x18] sm:$0xf]
    %v255 = vld [vmem:[%s247 + $0x1c] sm:$0xf]
    %v256 = vld [vmem:[%s247 + $0x20] sm:$0xf]
    %v257 = vld [vmem:[%s247 + $0x24] sm:$0xf]
    %v258 = vld [vmem:[%s247 + $0x28] sm:$0xf]
    %v259 = vld [vmem:[%s247 + $0x2c] sm:$0xf]
    %v260 = vld [vmem:[%s247 + $0x30] sm:$0xf]
    %v261 = vld [vmem:[%s247 + $0x34] sm:$0xf]
    %v262 = vld [vmem:[%s247 + $0x38] sm:$0xf]
    %v263 = vld [vmem:[%s247 + $0x3c] sm:$0xf]
    %v264 = vld [vmem:[%s247 + $0x40] sm:$0xf]
    %v265 = vld [vmem:[%s247 + $0x44] sm:$0xf]
    %v266 = vld [vmem:[%s247 + $0x48] sm:$0xf]
    %v267 = vld [vmem:[%s247 + $0x4c] sm:$0xf]
    %v268 = vld [vmem:[%s247 + $0x50] sm:$0xf]
    %v269 = vld [vmem:[%s247 + $0x54] sm:$0xf]
    %v270 = vld [vmem:[%s247 + $0x58] sm:$0xf]
    %v271 = vld [vmem:[%s247 + $0x5c] sm:$0xf]
    %v272 = vld [vmem:[%s247 + $0x60] sm:$0xf]
    %v273 = vld [vmem:[%s247 + $0x64] sm:$0xf]
    %v274 = vld [vmem:[%s247 + $0x68] sm:$0xf]
    %v275 = vld [vmem:[%s247 + $0x6c] sm:$0xf]
    %v276 = vld [vmem:[%s247 + $0x70] sm:$0xf]
    %v277 = vld [vmem:[%s247 + $0x74] sm:$0xf]
    %v278 = vld [vmem:[%s247 + $0x78] sm:$0xf]
    %v279 = vld [vmem:[%s247 + $0x7c] sm:$0xf]
    %s280 = scalar_lea.vmem %s4, 1
    %v281 = vld [vmem:[%s280] sm:$0x1]
    %v283 = vlaneseq
    %v284 = vshrl.u32 %v283, 7
    %v285 = vsub.s32 0, %v284
    %v286 = vrot.slane %v281, %v285
    %v320 = vunpack.c.l.b16 %v248
    %v321 = vunpack.c.l.b16 %v249
    %v322 = vunpack.c.l.b16 %v250
    %v323 = vunpack.c.l.b16 %v251
    %v324 = vunpack.c.l.b16 %v252
    %v325 = vunpack.c.l.b16 %v253
    %v326 = vunpack.c.l.b16 %v254
    %v327 = vunpack.c.l.b16 %v255
    %v328 = vunpack.c.l.b16 %v256
    %v329 = vunpack.c.l.b16 %v257
    %v330 = vunpack.c.l.b16 %v258
    %v331 = vunpack.c.l.b16 %v259
    %v332 = vunpack.c.l.b16 %v260
    %v333 = vunpack.c.l.b16 %v261
    %v334 = vunpack.c.l.b16 %v262
    %v335 = vunpack.c.l.b16 %v263
    %v336 = vunpack.c.l.b16 %v264
    %v337 = vunpack.c.l.b16 %v265
    %v338 = vunpack.c.l.b16 %v266
    %v339 = vunpack.c.l.b16 %v267
    %v340 = vunpack.c.l.b16 %v268
    %v341 = vunpack.c.l.b16 %v269
    %v342 = vunpack.c.l.b16 %v270
    %v343 = vunpack.c.l.b16 %v271
    %v344 = vunpack.c.l.b16 %v272
    %v345 = vunpack.c.l.b16 %v273
    %v346 = vunpack.c.l.b16 %v274
    %v347 = vunpack.c.l.b16 %v275
    %v348 = vunpack.c.l.b16 %v276
    %v349 = vunpack.c.l.b16 %v277
    %v350 = vunpack.c.l.b16 %v278
    %v351 = vunpack.c.l.b16 %v279
    %v352 = vpack.c.b16 %v321, %v320
    %v353 = vpack.c.b16 %v323, %v322
    %v354 = vpack.c.b16 %v325, %v324
    %v355 = vpack.c.b16 %v327, %v326
    %v356 = vpack.c.b16 %v329, %v328
    %v357 = vpack.c.b16 %v331, %v330
    %v358 = vpack.c.b16 %v333, %v332
    %v359 = vpack.c.b16 %v335, %v334
    %v360 = vpack.c.b16 %v337, %v336
    %v361 = vpack.c.b16 %v339, %v338
    %v362 = vpack.c.b16 %v341, %v340
    %v363 = vpack.c.b16 %v343, %v342
    %v364 = vpack.c.b16 %v345, %v344
    %v365 = vpack.c.b16 %v347, %v346
    %v366 = vpack.c.b16 %v349, %v348
    %v367 = vpack.c.b16 %v351, %v350
    %384 = vmatprep.subr.bf16.mxu0 0
    %385 = vmatpush1.bf16.msra.mxu0 %v359
    %386 = vmatprep.subr.bf16.mxu0 0
    %387 = vmatpush1.bf16.msra.mxu0 %v358
    %388 = vmatprep.subr.bf16.mxu0 0
    %389 = vmatpush1.bf16.msra.mxu0 %v357
    %390 = vmatprep.subr.bf16.mxu0 0
    %391 = vmatpush1.bf16.msra.mxu0 %v356
    %392 = vmatprep.subr.bf16.mxu0 0
    %393 = vmatpush1.bf16.msra.mxu0 %v355
    %394 = vmatprep.subr.bf16.mxu0 0
    %395 = vmatpush1.bf16.msra.mxu0 %v354
    %396 = vmatprep.subr.bf16.mxu0 0
    %397 = vmatpush1.bf16.msra.mxu0 %v353
    %398 = vmatprep.subr.bf16.mxu0 0
    %399 = vmatpush1.bf16.msra.mxu0 %v352
    %400 = vmatprep.subr.bf16.mxu0 0
    %401 = vmatpush2.bf16.msra.mxu0 %v367
    %402 = vmatprep.subr.bf16.mxu0 0
    %403 = vmatpush2.bf16.msra.mxu0 %v366
    %404 = vmatprep.subr.bf16.mxu0 0
    %405 = vmatpush2.bf16.msra.mxu0 %v365
    %406 = vmatprep.subr.bf16.mxu0 0
    %407 = vmatpush2.bf16.msra.mxu0 %v364
    %408 = vmatprep.subr.bf16.mxu0 0
    %409 = vmatpush2.bf16.msra.mxu0 %v363
    %410 = vmatprep.subr.bf16.mxu0 0
    %411 = vmatpush2.bf16.msra.mxu0 %v362
    %412 = vmatprep.subr.bf16.mxu0 0
    %413 = vmatpush2.bf16.msra.mxu0 %v361
    %414 = vmatprep.subr.bf16.mxu0 0
    %415 = vmatpush2.bf16.msra.mxu0 %v360
    %416 = vmatprep.mubr.bf16.mxu0 %v246
    %417 = vmatmul.mubr.bf16.gmra.mxu0 %v245
    %v418 = vpop.f32.mrf.mxu0
    %v419 = vadd.f32 %v286, %v418
    %v420 = vpop.f32.mrf.mxu0
    %v421 = vpop.f32.mrf.mxu0
    %v422 = vpop.f32.mrf.mxu0
    %423 = vdwg.mxu0
    %v424 = vmax.f32 %v419, 0.0
    %v425 = vpack.c.bf16 %v424, %v424
    %v426 = vld [vmem:[%s2] sm:$0xff]
    %v427 = vld [vmem:[%s2 + $0x8] sm:$0xff]
    %v428 = vpack.c.bf16 %v426, %v426
    %v429 = vpack.c.bf16 %v427, %v427
    %s430 = scalar_lea.vmem [#allocation2], 256
    %v431 = vld [vmem:[%s430] sm:$0xf]
    %v432 = vld [vmem:[%s430 + $0x4] sm:$0xf]
    %v433 = vld [vmem:[%s430 + $0x8] sm:$0xf]
    %v434 = vld [vmem:[%s430 + $0xc] sm:$0xf]
    %v435 = vld [vmem:[%s430 + $0x10] sm:$0xf]
    %v436 = vld [vmem:[%s430 + $0x14] sm:$0xf]
    %v437 = vld [vmem:[%s430 + $0x18] sm:$0xf]
    %v438 = vld [vmem:[%s430 + $0x1c] sm:$0xf]
    %v439 = vld [vmem:[%s430 + $0x20] sm:$0xf]
    %v440 = vld [vmem:[%s430 + $0x24] sm:$0xf]
    %v441 = vld [vmem:[%s430 + $0x28] sm:$0xf]
    %v442 = vld [vmem:[%s430 + $0x2c] sm:$0xf]
    %v443 = vld [vmem:[%s430 + $0x30] sm:$0xf]
    %v444 = vld [vmem:[%s430 + $0x34] sm:$0xf]
    %v445 = vld [vmem:[%s430 + $0x38] sm:$0xf]
    %v446 = vld [vmem:[%s430 + $0x3c] sm:$0xf]
    %v447 = vld [vmem:[%s430 + $0x40] sm:$0xf]
    %v448 = vld [vmem:[%s430 + $0x44] sm:$0xf]
    %v449 = vld [vmem:[%s430 + $0x48] sm:$0xf]
    %v450 = vld [vmem:[%s430 + $0x4c] sm:$0xf]
    %v451 = vld [vmem:[%s430 + $0x50] sm:$0xf]
    %v452 = vld [vmem:[%s430 + $0x54] sm:$0xf]
    %v453 = vld [vmem:[%s430 + $0x58] sm:$0xf]
    %v454 = vld [vmem:[%s430 + $0x5c] sm:$0xf]
    %v455 = vld [vmem:[%s430 + $0x60] sm:$0xf]
    %v456 = vld [vmem:[%s430 + $0x64] sm:$0xf]
    %v457 = vld [vmem:[%s430 + $0x68] sm:$0xf]
    %v458 = vld [vmem:[%s430 + $0x6c] sm:$0xf]
    %v459 = vld [vmem:[%s430 + $0x70] sm:$0xf]
    %v460 = vld [vmem:[%s430 + $0x74] sm:$0xf]
    %v461 = vld [vmem:[%s430 + $0x78] sm:$0xf]
    %v462 = vld [vmem:[%s430 + $0x7c] sm:$0xf]
    %s463 = scalar_lea.vmem %s4, 2
    %v464 = vld [vmem:[%s463] sm:$0x1]
    %v466 = vlaneseq
    %v467 = vshrl.u32 %v466, 7
    %v468 = vsub.s32 0, %v467
    %v469 = vrot.slane %v464, %v468
    %v503 = vunpack.c.l.b16 %v431
    %v504 = vunpack.c.l.b16 %v432
    %v505 = vunpack.c.l.b16 %v433
    %v506 = vunpack.c.l.b16 %v434
    %v507 = vunpack.c.l.b16 %v435
    %v508 = vunpack.c.l.b16 %v436
    %v509 = vunpack.c.l.b16 %v437
    %v510 = vunpack.c.l.b16 %v438
    %v511 = vunpack.c.l.b16 %v439
    %v512 = vunpack.c.l.b16 %v440
    %v513 = vunpack.c.l.b16 %v441
    %v514 = vunpack.c.l.b16 %v442
    %v515 = vunpack.c.l.b16 %v443
    %v516 = vunpack.c.l.b16 %v444
    %v517 = vunpack.c.l.b16 %v445
    %v518 = vunpack.c.l.b16 %v446
    %v519 = vunpack.c.l.b16 %v447
    %v520 = vunpack.c.l.b16 %v448
    %v521 = vunpack.c.l.b16 %v449
    %v522 = vunpack.c.l.b16 %v450
    %v523 = vunpack.c.l.b16 %v451
    %v524 = vunpack.c.l.b16 %v452
    %v525 = vunpack.c.l.b16 %v453
    %v526 = vunpack.c.l.b16 %v454
    %v527 = vunpack.c.l.b16 %v455
    %v528 = vunpack.c.l.b16 %v456
    %v529 = vunpack.c.l.b16 %v457
    %v530 = vunpack.c.l.b16 %v458
    %v531 = vunpack.c.l.b16 %v459
    %v532 = vunpack.c.l.b16 %v460
    %v533 = vunpack.c.l.b16 %v461
    %v534 = vunpack.c.l.b16 %v462
    %v535 = vpack.c.b16 %v504, %v503
    %v536 = vpack.c.b16 %v506, %v505
    %v537 = vpack.c.b16 %v508, %v507
    %v538 = vpack.c.b16 %v510, %v509
    %v539 = vpack.c.b16 %v512, %v511
    %v540 = vpack.c.b16 %v514, %v513
    %v541 = vpack.c.b16 %v516, %v515
    %v542 = vpack.c.b16 %v518, %v517
    %v543 = vpack.c.b16 %v520, %v519
    %v544 = vpack.c.b16 %v522, %v521
    %v545 = vpack.c.b16 %v524, %v523
    %v546 = vpack.c.b16 %v526, %v525
    %v547 = vpack.c.b16 %v528, %v527
    %v548 = vpack.c.b16 %v530, %v529
    %v549 = vpack.c.b16 %v532, %v531
    %v550 = vpack.c.b16 %v534, %v533
    %567 = vmatprep.subr.bf16.mxu0 0
    %568 = vmatpush1.bf16.msra.mxu0 %v542
    %569 = vmatprep.subr.bf16.mxu0 0
    %570 = vmatpush1.bf16.msra.mxu0 %v541
    %571 = vmatprep.subr.bf16.mxu0 0
    %572 = vmatpush1.bf16.msra.mxu0 %v540
    %573 = vmatprep.subr.bf16.mxu0 0
    %574 = vmatpush1.bf16.msra.mxu0 %v539
    %575 = vmatprep.subr.bf16.mxu0 0
    %576 = vmatpush1.bf16.msra.mxu0 %v538
    %577 = vmatprep.subr.bf16.mxu0 0
    %578 = vmatpush1.bf16.msra.mxu0 %v537
    %579 = vmatprep.subr.bf16.mxu0 0
    %580 = vmatpush1.bf16.msra.mxu0 %v536
    %581 = vmatprep.subr.bf16.mxu0 0
    %582 = vmatpush1.bf16.msra.mxu0 %v535
    %583 = vmatprep.subr.bf16.mxu0 0
    %584 = vmatpush2.bf16.msra.mxu0 %v550
    %585 = vmatprep.subr.bf16.mxu0 0
    %586 = vmatpush2.bf16.msra.mxu0 %v549
    %587 = vmatprep.subr.bf16.mxu0 0
    %588 = vmatpush2.bf16.msra.mxu0 %v548
    %589 = vmatprep.subr.bf16.mxu0 0
    %590 = vmatpush2.bf16.msra.mxu0 %v547
    %591 = vmatprep.subr.bf16.mxu0 0
    %592 = vmatpush2.bf16.msra.mxu0 %v546
    %593 = vmatprep.subr.bf16.mxu0 0
    %594 = vmatpush2.bf16.msra.mxu0 %v545
    %595 = vmatprep.subr.bf16.mxu0 0
    %596 = vmatpush2.bf16.msra.mxu0 %v544
    %597 = vmatprep.subr.bf16.mxu0 0
    %598 = vmatpush2.bf16.msra.mxu0 %v543
    %599 = vmatprep.mubr.bf16.mxu0 %v429
    %600 = vmatmul.mubr.bf16.gmra.mxu0 %v428
    %v601 = vpop.f32.mrf.mxu0
    %v602 = vadd.f32 %v469, %v601
    %v603 = vpop.f32.mrf.mxu0
    %v604 = vpop.f32.mrf.mxu0
    %v605 = vpop.f32.mrf.mxu0
    %606 = vdwg.mxu0
    %v607 = vmax.f32 %v602, 0.0
    %v608 = vpack.c.bf16 %v607, %v607
    %v609 = vld [vmem:[#allocation5] sm:$0xf]
    %v610 = vld [vmem:[#allocation5 + $0x4] sm:$0xf]
    %v611 = vld [vmem:[#allocation5 + $0x8] sm:$0xf]
    %v612 = vld [vmem:[#allocation5 + $0xc] sm:$0xf]
    %v613 = vld [vmem:[#allocation5 + $0x10] sm:$0xf]
    %v614 = vld [vmem:[#allocation5 + $0x14] sm:$0xf]
    %v615 = vld [vmem:[#allocation5 + $0x18] sm:$0xf]
    %v616 = vld [vmem:[#allocation5 + $0x1c] sm:$0xf]
    %v617 = vld [vmem:[#allocation5 + $0x20] sm:$0xf]
    %v618 = vld [vmem:[#allocation5 + $0x24] sm:$0xf]
    %v619 = vld [vmem:[#allocation5 + $0x28] sm:$0xf]
    %v620 = vld [vmem:[#allocation5 + $0x2c] sm:$0xf]
    %v621 = vld [vmem:[#allocation5 + $0x30] sm:$0xf]
    %v622 = vld [vmem:[#allocation5 + $0x34] sm:$0xf]
    %v623 = vld [vmem:[#allocation5 + $0x38] sm:$0xf]
    %v624 = vld [vmem:[#allocation5 + $0x3c] sm:$0xf]
    %v625 = vld [vmem:[#allocation5 + $0x40] sm:$0xf]
    %v626 = vld [vmem:[#allocation5 + $0x44] sm:$0xf]
    %v627 = vld [vmem:[#allocation5 + $0x48] sm:$0xf]
    %v628 = vld [vmem:[#allocation5 + $0x4c] sm:$0xf]
    %v629 = vld [vmem:[#allocation5 + $0x50] sm:$0xf]
    %v630 = vld [vmem:[#allocation5 + $0x54] sm:$0xf]
    %v631 = vld [vmem:[#allocation5 + $0x58] sm:$0xf]
    %v632 = vld [vmem:[#allocation5 + $0x5c] sm:$0xf]
    %v633 = vld [vmem:[#allocation5 + $0x60] sm:$0xf]
    %v634 = vld [vmem:[#allocation5 + $0x64] sm:$0xf]
    %v635 = vld [vmem:[#allocation5 + $0x68] sm:$0xf]
    %v636 = vld [vmem:[#allocation5 + $0x6c] sm:$0xf]
    %v637 = vld [vmem:[#allocation5 + $0x70] sm:$0xf]
    %v638 = vld [vmem:[#allocation5 + $0x74] sm:$0xf]
    %v639 = vld [vmem:[#allocation5 + $0x78] sm:$0xf]
    %v640 = vld [vmem:[#allocation5 + $0x7c] sm:$0xf]
    %v641 = vld [vmem:[#allocation5 + $0x80] sm:$0xf]
    %v642 = vld [vmem:[#allocation5 + $0x84] sm:$0xf]
    %v643 = vld [vmem:[#allocation5 + $0x88] sm:$0xf]
    %v644 = vld [vmem:[#allocation5 + $0x8c] sm:$0xf]
    %v645 = vld [vmem:[#allocation5 + $0x90] sm:$0xf]
    %v646 = vld [vmem:[#allocation5 + $0x94] sm:$0xf]
    %v647 = vld [vmem:[#allocation5 + $0x98] sm:$0xf]
    %v648 = vld [vmem:[#allocation5 + $0x9c] sm:$0xf]
    %v649 = vld [vmem:[#allocation5 + $0xa0] sm:$0xf]
    %v650 = vld [vmem:[#allocation5 + $0xa4] sm:$0xf]
    %v651 = vld [vmem:[#allocation5 + $0xa8] sm:$0xf]
    %v652 = vld [vmem:[#allocation5 + $0xac] sm:$0xf]
    %v653 = vld [vmem:[#allocation5 + $0xb0] sm:$0xf]
    %v654 = vld [vmem:[#allocation5 + $0xb4] sm:$0xf]
    %v655 = vld [vmem:[#allocation5 + $0xb8] sm:$0xf]
    %v656 = vld [vmem:[#allocation5 + $0xbc] sm:$0xf]
    %v657 = vld [vmem:[%s6] sm:$0x1]
    %v659 = vlaneseq
    %v660 = vshrl.u32 %v659, 7
    %v661 = vsub.s32 0, %v660
    %v662 = vrot.slane %v657, %v661
    %v712 = vunpack.c.l.b16 %v609
    %v713 = vunpack.c.l.b16 %v610
    %v714 = vunpack.c.l.b16 %v611
    %v715 = vunpack.c.l.b16 %v612
    %v716 = vunpack.c.l.b16 %v613
    %v717 = vunpack.c.l.b16 %v614
    %v718 = vunpack.c.l.b16 %v615
    %v719 = vunpack.c.l.b16 %v616
    %v720 = vunpack.c.l.b16 %v617
    %v721 = vunpack.c.l.b16 %v618
    %v722 = vunpack.c.l.b16 %v619
    %v723 = vunpack.c.l.b16 %v620
    %v724 = vunpack.c.l.b16 %v621
    %v725 = vunpack.c.l.b16 %v622
    %v726 = vunpack.c.l.b16 %v623
    %v727 = vunpack.c.l.b16 %v624
    %v728 = vunpack.c.l.b16 %v625
    %v729 = vunpack.c.l.b16 %v626
    %v730 = vunpack.c.l.b16 %v627
    %v731 = vunpack.c.l.b16 %v628
    %v732 = vunpack.c.l.b16 %v629
    %v733 = vunpack.c.l.b16 %v630
    %v734 = vunpack.c.l.b16 %v631
    %v735 = vunpack.c.l.b16 %v632
    %v736 = vunpack.c.l.b16 %v633
    %v737 = vunpack.c.l.b16 %v634
    %v738 = vunpack.c.l.b16 %v635
    %v739 = vunpack.c.l.b16 %v636
    %v740 = vunpack.c.l.b16 %v637
    %v741 = vunpack.c.l.b16 %v638
    %v742 = vunpack.c.l.b16 %v639
    %v743 = vunpack.c.l.b16 %v640
    %v744 = vunpack.c.l.b16 %v641
    %v745 = vunpack.c.l.b16 %v642
    %v746 = vunpack.c.l.b16 %v643
    %v747 = vunpack.c.l.b16 %v644
    %v748 = vunpack.c.l.b16 %v645
    %v749 = vunpack.c.l.b16 %v646
    %v750 = vunpack.c.l.b16 %v647
    %v751 = vunpack.c.l.b16 %v648
    %v752 = vunpack.c.l.b16 %v649
    %v753 = vunpack.c.l.b16 %v650
    %v754 = vunpack.c.l.b16 %v651
    %v755 = vunpack.c.l.b16 %v652
    %v756 = vunpack.c.l.b16 %v653
    %v757 = vunpack.c.l.b16 %v654
    %v758 = vunpack.c.l.b16 %v655
    %v759 = vunpack.c.l.b16 %v656
    %v760 = vpack.c.b16 %v713, %v712
    %v761 = vpack.c.b16 %v715, %v714
    %v762 = vpack.c.b16 %v717, %v716
    %v763 = vpack.c.b16 %v719, %v718
    %v764 = vpack.c.b16 %v721, %v720
    %v765 = vpack.c.b16 %v723, %v722
    %v766 = vpack.c.b16 %v725, %v724
    %v767 = vpack.c.b16 %v727, %v726
    %v768 = vpack.c.b16 %v729, %v728
    %v769 = vpack.c.b16 %v731, %v730
    %v770 = vpack.c.b16 %v733, %v732
    %v771 = vpack.c.b16 %v735, %v734
    %v772 = vpack.c.b16 %v737, %v736
    %v773 = vpack.c.b16 %v739, %v738
    %v774 = vpack.c.b16 %v741, %v740
    %v775 = vpack.c.b16 %v743, %v742
    %v776 = vpack.c.b16 %v745, %v744
    %v777 = vpack.c.b16 %v747, %v746
    %v778 = vpack.c.b16 %v749, %v748
    %v779 = vpack.c.b16 %v751, %v750
    %v780 = vpack.c.b16 %v753, %v752
    %v781 = vpack.c.b16 %v755, %v754
    %v782 = vpack.c.b16 %v757, %v756
    %v783 = vpack.c.b16 %v759, %v758
    %808 = vmatprep.subr.bf16.mxu0 0
    %809 = vmatpush1.bf16.msra.mxu0 %v767
    %810 = vmatprep.subr.bf16.mxu0 0
    %811 = vmatpush1.bf16.msra.mxu0 %v766
    %812 = vmatprep.subr.bf16.mxu0 0
    %813 = vmatpush1.bf16.msra.mxu0 %v765
    %814 = vmatprep.subr.bf16.mxu0 0
    %815 = vmatpush1.bf16.msra.mxu0 %v764
    %816 = vmatprep.subr.bf16.mxu0 0
    %817 = vmatpush1.bf16.msra.mxu0 %v763
    %818 = vmatprep.subr.bf16.mxu0 0
    %819 = vmatpush1.bf16.msra.mxu0 %v762
    %820 = vmatprep.subr.bf16.mxu0 0
    %821 = vmatpush1.bf16.msra.mxu0 %v761
    %822 = vmatprep.subr.bf16.mxu0 0
    %823 = vmatpush1.bf16.msra.mxu0 %v760
    %824 = vmatprep.subr.bf16.mxu0 0
    %825 = vmatpush2.bf16.msra.mxu0 %v775
    %826 = vmatprep.subr.bf16.mxu0 0
    %827 = vmatpush2.bf16.msra.mxu0 %v774
    %828 = vmatprep.subr.bf16.mxu0 0
    %829 = vmatpush2.bf16.msra.mxu0 %v773
    %830 = vmatprep.subr.bf16.mxu0 0
    %831 = vmatpush2.bf16.msra.mxu0 %v772
    %832 = vmatprep.subr.bf16.mxu0 0
    %833 = vmatpush2.bf16.msra.mxu0 %v771
    %834 = vmatprep.subr.bf16.mxu0 0
    %835 = vmatpush2.bf16.msra.mxu0 %v770
    %836 = vmatprep.subr.bf16.mxu0 0
    %837 = vmatpush2.bf16.msra.mxu0 %v769
    %838 = vmatprep.subr.bf16.mxu0 0
    %839 = vmatpush2.bf16.msra.mxu0 %v768
    %840 = vmatprep.mubr.bf16.mxu0 %v425
    %841 = vmatmul.mubr.bf16.gmra.mxu0 %v242
    %v842 = vpop.f32.mrf.mxu0
    %v843 = vadd.f32 %v662, %v842
    %v844 = vpop.f32.mrf.mxu0
    %v845 = vpop.f32.mrf.mxu0
    %v846 = vpop.f32.mrf.mxu0
    %847 = vdwg.mxu0
    %848 = vmatprep.subr.bf16.mxu0 0
    %849 = vmatpush1.bf16.msra.mxu0 %v783
    %850 = vmatprep.subr.bf16.mxu0 0
    %851 = vmatpush1.bf16.msra.mxu0 %v782
    %852 = vmatprep.subr.bf16.mxu0 0
    %853 = vmatpush1.bf16.msra.mxu0 %v781
    %854 = vmatprep.subr.bf16.mxu0 0
    %855 = vmatpush1.bf16.msra.mxu0 %v780
    %856 = vmatprep.subr.bf16.mxu0 0
    %857 = vmatpush1.bf16.msra.mxu0 %v779
    %858 = vmatprep.subr.bf16.mxu0 0
    %859 = vmatpush1.bf16.msra.mxu0 %v778
    %860 = vmatprep.subr.bf16.mxu0 0
    %861 = vmatpush1.bf16.msra.mxu0 %v777
    %862 = vmatprep.subr.bf16.mxu0 0
    %863 = vmatpush1.bf16.msra.mxu0 %v776
    %864 = vmatprep.subr.bf16.mxu0 0
    %865 = vmatpush2.bf16.msra.mxu0 0
    %866 = vmatprep.subr.bf16.mxu0 0
    %867 = vmatpush2.bf16.msra.mxu0 0
    %868 = vmatprep.subr.bf16.mxu0 0
    %869 = vmatpush2.bf16.msra.mxu0 0
    %870 = vmatprep.subr.bf16.mxu0 0
    %871 = vmatpush2.bf16.msra.mxu0 0
    %872 = vmatprep.subr.bf16.mxu0 0
    %873 = vmatpush2.bf16.msra.mxu0 0
    %874 = vmatprep.subr.bf16.mxu0 0
    %875 = vmatpush2.bf16.msra.mxu0 0
    %876 = vmatprep.subr.bf16.mxu0 0
    %877 = vmatpush2.bf16.msra.mxu0 0
    %878 = vmatprep.subr.bf16.mxu0 0
    %879 = vmatpush2.bf16.msra.mxu0 0
    %880 = vmatprep.mubr.bf16.mxu0 0
    %881 = vmatmul.mubr.bf16.gmra.mxu0 %v608
    %v882 = vpop.f32.mrf.mxu0
    %v883 = vadd.f32 %v843, %v882
    %v884 = vpop.f32.mrf.mxu0
    %v885 = vpop.f32.mrf.mxu0
    %v886 = vpop.f32.mrf.mxu0
    %887 = vdwg.mxu0
    %v888 = vmax.f32 %v883, 0.0
    %v889 = vpack.c.bf16 %v888, %v888
    %v890 = vld [vmem:[%s7] sm:$0xf]
    %v891 = vld [vmem:[%s7 + $0x4] sm:$0xf]
    %v892 = vld [vmem:[%s7 + $0x8] sm:$0xf]
    %v893 = vld [vmem:[%s7 + $0xc] sm:$0xf]
    %v894 = vld [vmem:[%s7 + $0x10] sm:$0xf]
    %v895 = vld [vmem:[%s7 + $0x14] sm:$0xf]
    %v896 = vld [vmem:[%s7 + $0x18] sm:$0xf]
    %v897 = vld [vmem:[%s7 + $0x1c] sm:$0xf]
    %v898 = vld [vmem:[%s7 + $0x20] sm:$0xf]
    %v899 = vld [vmem:[%s7 + $0x24] sm:$0xf]
    %v900 = vld [vmem:[%s7 + $0x28] sm:$0xf]
    %v901 = vld [vmem:[%s7 + $0x2c] sm:$0xf]
    %v902 = vld [vmem:[%s7 + $0x30] sm:$0xf]
    %v903 = vld [vmem:[%s7 + $0x34] sm:$0xf]
    %v904 = vld [vmem:[%s7 + $0x38] sm:$0xf]
    %v905 = vld [vmem:[%s7 + $0x3c] sm:$0xf]
    %v906 = vld [vmem:[%s8] sm:$0x1]
    %v908 = vlaneseq
    %v909 = vshrl.u32 %v908, 7
    %v910 = vsub.s32 0, %v909
    %v911 = vrot.slane %v906, %v910
    %v929 = vunpack.c.l.b16 %v890
    %v930 = vunpack.c.l.b16 %v891
    %v931 = vunpack.c.l.b16 %v892
    %v932 = vunpack.c.l.b16 %v893
    %v933 = vunpack.c.l.b16 %v894
    %v934 = vunpack.c.l.b16 %v895
    %v935 = vunpack.c.l.b16 %v896
    %v936 = vunpack.c.l.b16 %v897
    %v937 = vunpack.c.l.b16 %v898
    %v938 = vunpack.c.l.b16 %v899
    %v939 = vunpack.c.l.b16 %v900
    %v940 = vunpack.c.l.b16 %v901
    %v941 = vunpack.c.l.b16 %v902
    %v942 = vunpack.c.l.b16 %v903
    %v943 = vunpack.c.l.b16 %v904
    %v944 = vunpack.c.l.b16 %v905
    %v945 = vpack.c.b16 %v930, %v929
    %v946 = vpack.c.b16 %v932, %v931
    %v947 = vpack.c.b16 %v934, %v933
    %v948 = vpack.c.b16 %v936, %v935
    %v949 = vpack.c.b16 %v938, %v937
    %v950 = vpack.c.b16 %v940, %v939
    %v951 = vpack.c.b16 %v942, %v941
    %v952 = vpack.c.b16 %v944, %v943
    %961 = vmatprep.subr.bf16.mxu0 0
    %962 = vmatpush1.bf16.msra.mxu0 %v952
    %963 = vmatprep.subr.bf16.mxu0 0
    %964 = vmatpush1.bf16.msra.mxu0 %v951
    %965 = vmatprep.subr.bf16.mxu0 0
    %966 = vmatpush1.bf16.msra.mxu0 %v950
    %967 = vmatprep.subr.bf16.mxu0 0
    %968 = vmatpush1.bf16.msra.mxu0 %v949
    %969 = vmatprep.subr.bf16.mxu0 0
    %970 = vmatpush1.bf16.msra.mxu0 %v948
    %971 = vmatprep.subr.bf16.mxu0 0
    %972 = vmatpush1.bf16.msra.mxu0 %v947
    %973 = vmatprep.subr.bf16.mxu0 0
    %974 = vmatpush1.bf16.msra.mxu0 %v946
    %975 = vmatprep.subr.bf16.mxu0 0
    %976 = vmatpush1.bf16.msra.mxu0 %v945
    %977 = vmatprep.subr.bf16.mxu0 0
    %978 = vmatpush2.bf16.msra.mxu0 0
    %979 = vmatprep.subr.bf16.mxu0 0
    %980 = vmatpush2.bf16.msra.mxu0 0
    %981 = vmatprep.subr.bf16.mxu0 0
    %982 = vmatpush2.bf16.msra.mxu0 0
    %983 = vmatprep.subr.bf16.mxu0 0
    %984 = vmatpush2.bf16.msra.mxu0 0
    %985 = vmatprep.subr.bf16.mxu0 0
    %986 = vmatpush2.bf16.msra.mxu0 0
    %987 = vmatprep.subr.bf16.mxu0 0
    %988 = vmatpush2.bf16.msra.mxu0 0
    %989 = vmatprep.subr.bf16.mxu0 0
    %990 = vmatpush2.bf16.msra.mxu0 0
    %991 = vmatprep.subr.bf16.mxu0 0
    %992 = vmatpush2.bf16.msra.mxu0 0
    %993 = vmatprep.mubr.bf16.mxu0 0
    %994 = vmatmul.mubr.bf16.gmra.mxu0 %v889
    %v995 = vpop.f32.mrf.mxu0
    %v996 = vadd.f32 %v911, %v995
    %v997 = vpop.f32.mrf.mxu0
    %v998 = vpop.f32.mrf.mxu0
    %v999 = vpop.f32.mrf.mxu0
    %1000 = vdwg.mxu0
    %vm1001 = vcmask 523264
    %1002 = vst.msk [vmem:[#allocation7] sm:$0xff] %vm1001, %v996
    // Predicated region
    $region46: #{siamese_forward.1} parent=1 // pred_check
      _
    $region47: #{siamese_forward.1} parent=1 // pred_check_branch
      %1004 = sbr.rel (0) target = $region49
    $region48: #{siamese_forward.1} parent=1 // pred_region
      %s1006 = ssub.s32 128, 128
      %1007 = vsyncadd [#allocation4], %s1006
      %s1009 = sshll.u32 [#allocation7], 4
      %s1010 = int_to_ptr.vmem [resolvable:$true] %s1009
      %1012 = dma.vmem_to_hbm [thread:$0]  %s1010, 128, %s9, [#allocation4]
    $region49: #{siamese_forward.1} parent=1 // pred_fallthru
      _
    // Predicated region
    $region50: #{siamese_forward.1} parent=1 // pred_check
      _
    $region51: #{siamese_forward.1} parent=1 // pred_check_branch
      %1014 = sbr.rel (0) target = $region53
    $region52: #{siamese_forward.1} parent=1 // pred_region
      %1015 = dma.done [#allocation4], 128
    $region53: #{siamese_forward.1} parent=1 // pred_fallthru
      _
    %1016 = vsyncpa [#allocation3], 1
    %1017 = vsyncpa [#allocation6], 1
    %1018 = vsyncpa [#allocation4], 1

</llo_original>
